<compile_context>
chip_gen: v6e
topology: v6e:2x2x1
jax: 0.10.0
libtpu: 0.0.40
codegen_flags: <defaults>
</compile_context>

<pallas_src>
import functools

import jax
import jax.numpy as jnp
from jax.experimental import pallas as pl
from jax.experimental.pallas import tpu as pltpu


HIDDEN_DIM = 128
_VMEM_TILE_BUDGET = 24 * 1024 * 1024   # headroom under the 32 MiB scoped limit


def _round_up(n, m):
    return ((n + m - 1) // m) * m


def _choose_block_b(batch, obs_dim, block_b):
    """Batch tile: large, VMEM-safe, lane-aligned, >=2 grid steps for big batches."""
    lanes = _round_up(max(obs_dim, 1), 128)
    # Per batch row resident in VMEM: x tile (f32, lane-padded, double-buffered)
    # + in-kernel compute-dtype copy of x + (TB,128) h in f32 and compute dtype
    # + slack for the (8,TB) fc2 result / output double buffer.
    bytes_per_row = lanes * (2 * 4 + 2) + HIDDEN_DIM * (4 + 2) + 64
    vmem_rows = max(128, ((_VMEM_TILE_BUDGET // bytes_per_row) // 128) * 128)
    tb = min(max(128, (block_b // 128) * 128), vmem_rows)
    if _round_up(batch, 8) <= tb:
        # Whole batch fits in a single tile.
        if batch >= 512:
            # Split into two parallel grid steps so v7x's second TensorCore is
            # fed via dimension_semantics=("parallel",); no-op on v5e/v6e.
            tb = max(128, _round_up(-(-batch // 2), 128))
        else:
            tb = _round_up(batch, 8)
    return int(tb)


def _critic_kernel(x_ref, w1_ref, b1_ref, w2_ref, b2_ref, o_ref, *, compute_dtype):
    # fc1 on the MXU: cast the streamed x tile to the compute dtype on the VPU
    # (ample slack), accumulate in f32.
    x = x_ref[...].astype(compute_dtype)
    h = jnp.dot(x, w1_ref[...], preferred_element_type=jnp.float32)
    # Bias + ReLU in the compute dtype (bf16 on v6e/v7x halves VALU traffic).
    h = jnp.maximum(h.astype(compute_dtype) + b1_ref[...], 0)
    # fc2 on the (otherwise idle) MXU, contracting the hidden dim of BOTH
    # operands so the batch dim lands on lanes: the result is a lane-dense
    # (8, TB) slab whose row 0 is the value head (the other 7 rows are free
    # MXU padding).  This yields TB/128 unmasked stores + a contiguous
    # writeback DMA instead of TB/8 masked vst.msk for a (TB, 1) column.
    s = jax.lax.dot_general(
        w2_ref[...], h,
        dimension_numbers=(((1,), (1,)), ((), ())),
        preferred_element_type=jnp.float32)
    o_ref[...] = (s[0:1, :] + b2_ref[0, 0]).astype(o_ref.dtype)


def critic_forward(x, w1, b1, w2, b2, *, block_b=4096, compute_dtype=jnp.bfloat16):
    """Critic forward pass; returns float32 values of shape (B, 1).

    compute_dtype=jnp.bfloat16 (default) runs the MXU/VPU in bf16 with f32
    accumulation; pass jnp.float32 for exact PyTorch-f32 numerics (recommended
    on v5e, which has no bf16 VPU and no HBM-savings argument for bf16 here).
    """
    B, obs_dim = x.shape
    hidden = w1.shape[1]

    tb = _choose_block_b(B, obs_dim, block_b)
    num_blocks = pl.cdiv(B, tb)
    b_pad = num_blocks * tb

    # Tiny, one-time parameter prep (no pass over the (B, obs_dim) x stream).
    w1_c = w1.astype(compute_dtype)
    b1_row = b1.reshape(1, hidden).astype(compute_dtype)
    # Replicate the (1, H) fc2 weight row to 8 sublanes so the fc2 matmul has
    # an MXU-aligned M dim; only row 0 of its result is used.
    w2_rows = jnp.broadcast_to(w2.reshape(1, hidden), (8, hidden)).astype(compute_dtype)
    b2_2d = b2.reshape(1, 1).astype(jnp.float32)

    kernel = functools.partial(_critic_kernel, compute_dtype=compute_dtype)

    out = pl.pallas_call(
        kernel,
        out_shape=jax.ShapeDtypeStruct((1, b_pad), jnp.float32),
        grid=(num_blocks,),
        in_specs=[
            pl.BlockSpec((tb, obs_dim), lambda i: (i, 0)),      # x: streamed/pipelined
            pl.BlockSpec((obs_dim, hidden), lambda i: (0, 0)),  # w1: VMEM-resident
            pl.BlockSpec((1, hidden), lambda i: (0, 0)),        # b1: resident
            pl.BlockSpec((8, hidden), lambda i: (0, 0)),        # w2 rows: resident
            pl.BlockSpec(memory_space=pltpu.MemorySpace.SMEM),  # b2: SMEM scalar
        ],
        out_specs=pl.BlockSpec((1, tb), lambda i: (0, i)),      # lane-dense output row
        compiler_params=pltpu.CompilerParams(
            dimension_semantics=("parallel",),   # megacore sharding on v7x
            vmem_limit_bytes=32 * 1024 * 1024,
        ),
    )(x, w1_c, b1_row, w2_rows, b2_2d)

    return out[0, :B].reshape(B, 1)


def init_critic_params(key, obs_dim, hidden_dim=HIDDEN_DIM, dtype=jnp.float32):
    """PyTorch nn.Linear default init: U(-1/sqrt(fan_in), 1/sqrt(fan_in))."""
    k1, k2, k3, k4 = jax.random.split(key, 4)
    bound1 = 1.0 / jnp.sqrt(jnp.float32(obs_dim))
    bound2 = 1.0 / jnp.sqrt(jnp.float32(hidden_dim))
    w1 = jax.random.uniform(k1, (obs_dim, hidden_dim), dtype, -bound1, bound1)
    b1 = jax.random.uniform(k2, (hidden_dim,), dtype, -bound1, bound1)
    w2 = jax.random.uniform(k3, (hidden_dim, 1), dtype, -bound2, bound2)
    b2 = jax.random.uniform(k4, (1,), dtype, -bound2, bound2)
    return w1, b1, w2, b2


def critic_reference(x, w1, b1, w2, b2, compute_dtype=jnp.float32):
    """Pure-JAX reference mirroring the kernel's rounding points."""
    cd = compute_dtype
    h = jnp.dot(x.astype(cd), w1.astype(cd), preferred_element_type=jnp.float32)
    h = jnp.maximum(h.astype(cd) + b1.astype(cd)[None, :], 0).astype(cd)
    v = jnp.dot(h, w2.astype(cd), preferred_element_type=jnp.float32)
    return v + b2.astype(jnp.float32)[None, :]


if __name__ == "__main__":
    key = jax.random.PRNGKey(0)
    kx, kp, kx2 = jax.random.split(key, 3)

    B, obs_dim = 8, 32
    x = jax.random.normal(kx, (B, obs_dim), dtype=jnp.float32)
    w1, b1, w2, b2 = init_critic_params(kp, obs_dim)

    # Default path: bf16 compute, f32 accumulate.
    out = jax.block_until_ready(critic_forward(x, w1, b1, w2, b2))
    assert out.shape == (B, 1)
    ref_bf16 = critic_reference(x, w1, b1, w2, b2, compute_dtype=jnp.bfloat16)
    ref_f32 = critic_reference(x, w1, b1, w2, b2, compute_dtype=jnp.float32)
    assert jnp.allclose(out, ref_bf16, atol=2e-3, rtol=2e-3), "mismatch vs bf16-matched ref"
    assert jnp.allclose(out, ref_f32, atol=5e-2, rtol=5e-2), "mismatch vs f32 ref"

    # f32 compute path (PyTorch-matching numerics; recommended on v5e).
    out_f32 = jax.block_until_ready(
        critic_forward(x, w1, b1, w2, b2, compute_dtype=jnp.float32))
    assert jnp.allclose(out_f32, ref_f32, atol=1e-2, rtol=1e-2), "mismatch on f32 path"

    # Multi-block + ragged-tail path (grid > 1, B not a tile multiple, no pad copy).
    B2 = 1000
    x2 = jax.random.normal(kx2, (B2, obs_dim), dtype=jnp.float32)
    out2 = jax.block_until_ready(critic_forward(x2, w1, b1, w2, b2, block_b=256))
    ref2 = critic_reference(x2, w1, b1, w2, b2, compute_dtype=jnp.bfloat16)
    assert out2.shape == (B2, 1)
    assert jnp.allclose(out2, ref2, atol=2e-3, rtol=2e-3), "mismatch on tiled batch"

    # Auto-split path (single-tile batch >= 512 splits into 2 parallel steps for v7x).
    B3 = 768
    x3 = jax.random.normal(jax.random.PRNGKey(3), (B3, obs_dim), dtype=jnp.float32)
    out3 = jax.block_until_ready(critic_forward(x3, w1, b1, w2, b2))
    ref3 = critic_reference(x3, w1, b1, w2, b2, compute_dtype=jnp.bfloat16)
    assert out3.shape == (B3, 1)
    assert jnp.allclose(out3, ref3, atol=2e-3, rtol=2e-3), "mismatch on auto-split batch"

    print("KERNEL_OK")
</pallas_src>

<mosaic_0001>
module attributes {stable_mosaic.version = 11 : i64} {
  func.func @_critic_kernel(%arg0: i32, %arg1: memref<8x32xf32, #tpu.memory_space<vmem>>, %arg2: memref<32x128xbf16, #tpu.memory_space<vmem>>, %arg3: memref<1x128xbf16, #tpu.memory_space<vmem>>, %arg4: memref<8x128xbf16, #tpu.memory_space<vmem>>, %arg5: memref<1x1xf32, #tpu.memory_space<smem>>, %arg6: memref<1x8xf32, #tpu.memory_space<vmem>>) attributes {dimension_semantics = [#tpu.dimension_semantics<parallel>], iteration_bounds = array<i64: 1>, scalar_prefetch = 0 : i64, scratch_operands = 0 : i64, tpu.core_type = #tpu.core_type<tc>, window_params = [{transform_indices = @transform_0, window_bounds = array<i64: 8, 32>}, {pipeline_mode = #tpu.pipeline_mode<synchronous>, transform_indices = @transform_1, window_bounds = array<i64: 32, 128>}, {pipeline_mode = #tpu.pipeline_mode<synchronous>, transform_indices = @transform_2, window_bounds = array<i64: 1, 128>}, {pipeline_mode = #tpu.pipeline_mode<synchronous>, transform_indices = @transform_3, window_bounds = array<i64: 8, 128>}, {transform_indices = @transform_4, window_bounds = array<i64: 1, 1>}, {transform_indices = @transform_5, window_bounds = array<i64: 1, 8>}]} {
    %c0 = arith.constant 0 : index
    %c0_0 = arith.constant 0 : index
    %0 = vector.load %arg1[%c0, %c0_0] : memref<8x32xf32, #tpu.memory_space<vmem>>, vector<8x32xf32>
    %1 = arith.truncf %0 : vector<8x32xf32> to vector<8x32xbf16>
    %c0_1 = arith.constant 0 : index
    %c0_2 = arith.constant 0 : index
    %2 = vector.load %arg2[%c0_1, %c0_2] : memref<32x128xbf16, #tpu.memory_space<vmem>>, vector<32x128xbf16>
    %cst = arith.constant dense<0.000000e+00> : vector<8x128xf32>
    %3 = tpu.matmul %1, %2, %cst {dimension_numbers = #tpu.dot_dimension_numbers<[1], [0], [0], [1], [0, 0, 1, 1], [], []>} : vector<8x32xbf16>, vector<32x128xbf16>, vector<8x128xf32> -> vector<8x128xf32>
    %4 = arith.truncf %3 : vector<8x128xf32> to vector<8x128xbf16>
    %c0_3 = arith.constant 0 : index
    %c0_4 = arith.constant 0 : index
    %5 = vector.load %arg3[%c0_3, %c0_4] : memref<1x128xbf16, #tpu.memory_space<vmem>>, vector<1x128xbf16>
    %6 = vector.broadcast %5 : vector<1x128xbf16> to vector<8x128xbf16>
    %7 = arith.addf %4, %6 : vector<8x128xbf16>
    %cst_5 = arith.constant 0.000000e+00 : bf16
    %8 = vector.broadcast %cst_5 : bf16 to vector<8x128xbf16>
    %9 = arith.maximumf %7, %8 : vector<8x128xbf16>
    %c0_6 = arith.constant 0 : index
    %c0_7 = arith.constant 0 : index
    %10 = vector.load %arg4[%c0_6, %c0_7] : memref<8x128xbf16, #tpu.memory_space<vmem>>, vector<8x128xbf16>
    %cst_8 = arith.constant dense<0.000000e+00> : vector<8x8xf32>
    %11 = tpu.matmul %10, %9, %cst_8 {dimension_numbers = #tpu.dot_dimension_numbers<[1], [1], [0], [0], [0, 0, 1, 0], [], []>} : vector<8x128xbf16>, vector<8x128xbf16>, vector<8x8xf32> -> vector<8x8xf32>
    %12 = vector.extract_strided_slice %11 {offsets = [0, 0], sizes = [1, 8], strides = [1, 1]} : vector<8x8xf32> to vector<1x8xf32>
    %c0_9 = arith.constant 0 : index
    %c0_10 = arith.constant 0 : index
    %13 = memref.load %arg5[%c0_9, %c0_10] : memref<1x1xf32, #tpu.memory_space<smem>>
    %14 = vector.broadcast %13 : f32 to vector<1x8xf32>
    %15 = arith.addf %12, %14 : vector<1x8xf32>
    %c0_11 = arith.constant 0 : index
    %c0_12 = arith.constant 0 : index
    %16 = vector.load %arg6[%c0_11, %c0_12] : memref<1x8xf32, #tpu.memory_space<vmem>>, vector<1x8xf32>
    tpu.vector_store %arg6[%c0_11, %c0_12], %15 {strides = array<i32>} : memref<1x8xf32, #tpu.memory_space<vmem>>, vector<1x8xf32>,
    return
  }
  func.func @transform_0(%arg0: i32) -> (i32, i32) {
    %c0_i32 = arith.constant 0 : i32
    %c0_i32_0 = arith.constant 0 : i32
    return %arg0, %c0_i32 : i32, i32
  }
  func.func @transform_1(%arg0: i32) -> (i32, i32) {
    %c0_i32 = arith.constant 0 : i32
    %c0_i32_0 = arith.constant 0 : i32
    %c0_i32_1 = arith.constant 0 : i32
    return %c0_i32, %c0_i32_0 : i32, i32
  }
  func.func @transform_2(%arg0: i32) -> (i32, i32) {
    %c0_i32 = arith.constant 0 : i32
    %c0_i32_0 = arith.constant 0 : i32
    %c0_i32_1 = arith.constant 0 : i32
    return %c0_i32, %c0_i32_0 : i32, i32
  }
  func.func @transform_3(%arg0: i32) -> (i32, i32) {
    %c0_i32 = arith.constant 0 : i32
    %c0_i32_0 = arith.constant 0 : i32
    %c0_i32_1 = arith.constant 0 : i32
    return %c0_i32, %c0_i32_0 : i32, i32
  }
  func.func @transform_4(%arg0: i32) -> (i32, i32) {
    %c0_i32 = arith.constant 0 : i32
    %c0_i32_0 = arith.constant 0 : i32
    %c0_i32_1 = arith.constant 0 : i32
    return %c0_i32, %c0_i32_0 : i32, i32
  }
  func.func @transform_5(%arg0: i32) -> (i32, i32) {
    %c0_i32 = arith.constant 0 : i32
    %c0_i32_0 = arith.constant 0 : i32
    return %c0_i32, %arg0 : i32, i32
  }
}

</mosaic_0001>

<llo_original>
// kernel: tpu_custom_call.1
$region0: #{tpu_custom_call.1}
  #allocation0 [shape = 'u32[]', space=smem, size = 0x4, offset = 0x4, fixed_abs, tag = 'smem constant byte address 0x4 - core index']
  #allocation1 [shape = 'u32[144,128]{1,0:T(1,128)}', space=vmem, size = 0x12000, scoped, tag = 'internal scratch']
  #allocation2 [shape = 'f32[1,1]{1,0:T(1,128)S(6)}', space=smem, size = 0x200, scoped, tag = 'scoped memory for tpu_custom_call.1']
  %s0 = inlined_call_operand.hbm [shape: f32[8,32], index: 0, kind: input, shape index: {}]
  %s1 = inlined_call_operand.hbm [shape: bf16[32,128], index: 1, kind: input, shape index: {}]
  %s2 = inlined_call_operand.vmem [shape: bf16[1,128], index: 2, kind: input, shape index: {}]
  %s3 = inlined_call_operand.vmem [shape: bf16[8,128], index: 3, kind: input, shape index: {}]
  %s4 = inlined_call_operand.<no memory space> [shape: f32[1,1], index: 4, kind: input, shape index: {}]
  %s5 = inlined_call_operand.hbm [shape: f32[1,8], index: 5, kind: output, shape index: {}]
  %s6 = sld [smem:[#allocation0]]
  $region38: #{tpu_custom_call.1} parent=0
    _
  %s8 = ssub.s32 1, %s6
  %s9 = scalar_select 0, %s8, %s6
  %10 = sst [smem:[#allocation2]] %s4
  $region1: #{tpu_custom_call.1} parent=0
    #allocation3 [shape = 'u8[4096]{0}', space=vmem, size = 0x1000, scoped, tag = 'input window, operand 0, single buffered']
    #allocation4 [shape = 's32[1]{0}', space=sflag, size = 0x4, scoped, tag = 'scoped memory for tpu_custom_call.1']
    #allocation5 [shape = 's32[1]{0}', space=sflag, size = 0x4, scoped, tag = 'scoped memory for tpu_custom_call.1']
    #allocation6 [shape = 'u8[8192]{0}', space=vmem, size = 0x2000, scoped, tag = 'input window, operand 1, single buffered']
    #allocation7 [shape = 's32[1]{0}', space=sflag, size = 0x4, scoped, tag = 'scoped memory for tpu_custom_call.1']
    #allocation8 [shape = 'u8[512]{0}', space=vmem, size = 0x400, scoped, tag = 'output window, operand 0, single buffered']
    %11 = vsyncpa [#allocation4], 0
    %12 = vsyncpa [#allocation7], 0
    %13 = vsyncpa [#allocation5], 0
    // Predicated region
    $region2: #{tpu_custom_call.1} parent=1 // pred_check
      _
    $region3: #{tpu_custom_call.1} parent=1 // pred_check_branch
      %15 = sbr.rel (0) target = $region5
    $region4: #{tpu_custom_call.1} parent=1 // pred_region
      %s17 = ssub.s32 128, 128
      %18 = vsyncadd [#allocation4], %s17
      %s20 = sshll.u32 [#allocation3], 4
      %s21 = int_to_ptr.vmem [resolvable:$true] %s20
      %23 = dma.hbm_to_vmem [thread:$0]  %s0, 128, %s21, [#allocation4]
    $region5: #{tpu_custom_call.1} parent=1 // pred_fallthru
      _
    // Predicated region
    $region6: #{tpu_custom_call.1} parent=1 // pred_check
      _
    $region7: #{tpu_custom_call.1} parent=1 // pred_check_branch
      %25 = sbr.rel (0) target = $region9
    $region8: #{tpu_custom_call.1} parent=1 // pred_region
      %s27 = ssub.s32 256, 256
      %28 = vsyncadd [#allocation7], %s27
      %s29 = sshll.u32 [#allocation6], 4
      %s30 = int_to_ptr.vmem [resolvable:$true] %s29
      %35 = dma.hbm_to_vmem [thread:$0]  %s1, 256, %s30, [#allocation7], 64, 64, 4
    $region9: #{tpu_custom_call.1} parent=1 // pred_fallthru
      _
    // Predicated region
    $region10: #{tpu_custom_call.1} parent=1 // pred_check
      _
    $region11: #{tpu_custom_call.1} parent=1 // pred_check_branch
      %37 = sbr.rel (0) target = $region13
    $region12: #{tpu_custom_call.1} parent=1 // pred_region
      _
    $region13: #{tpu_custom_call.1} parent=1 // pred_fallthru
      _
    // Predicated region
    $region14: #{tpu_custom_call.1} parent=1 // pred_check
      _
    $region15: #{tpu_custom_call.1} parent=1 // pred_check_branch
      %39 = sbr.rel (0) target = $region17
    $region16: #{tpu_custom_call.1} parent=1 // pred_region
      _
    $region17: #{tpu_custom_call.1} parent=1 // pred_fallthru
      _
    // Predicated region
    $region18: #{tpu_custom_call.1} parent=1 // pred_check
      _
    $region19: #{tpu_custom_call.1} parent=1 // pred_check_branch
      %41 = sbr.rel (0) target = $region21
    $region20: #{tpu_custom_call.1} parent=1 // pred_region
      _
    $region21: #{tpu_custom_call.1} parent=1 // pred_fallthru
      _
    // Predicated region
    $region22: #{tpu_custom_call.1} parent=1 // pred_check
      _
    $region23: #{tpu_custom_call.1} parent=1 // pred_check_branch
      %43 = sbr.rel (0) target = $region25
    $region24: #{tpu_custom_call.1} parent=1 // pred_region
      %44 = dma.done [#allocation4], 128
    $region25: #{tpu_custom_call.1} parent=1 // pred_fallthru
      _
    // Predicated region
    $region26: #{tpu_custom_call.1} parent=1 // pred_check
      _
    $region27: #{tpu_custom_call.1} parent=1 // pred_check_branch
      %46 = sbr.rel (0) target = $region29
    $region28: #{tpu_custom_call.1} parent=1 // pred_region
      %47 = dma.done [#allocation7], 256
    $region29: #{tpu_custom_call.1} parent=1 // pred_fallthru
      _
    %v49 = vld [vmem:[#allocation3] sm:$0xff]
    %v50 = vpack.c.bf16 %v49, %v49
    %v51 = vld [vmem:[#allocation6] sm:$0xf]
    %v52 = vld [vmem:[#allocation6 + $0x4] sm:$0xf]
    %v53 = vld [vmem:[#allocation6 + $0x8] sm:$0xf]
    %v54 = vld [vmem:[#allocation6 + $0xc] sm:$0xf]
    %v59 = vunpack.c.l.b16 %v51
    %v60 = vunpack.c.l.b16 %v52
    %v61 = vunpack.c.l.b16 %v53
    %v62 = vunpack.c.l.b16 %v54
    %v63 = vpack.c.b16 %v60, %v59
    %v64 = vpack.c.b16 %v62, %v61
    %vm67 = vcmask 261120
    %v69 = vsel %vm67, %v50, 0
    %71 = vmatprep.subr.bf16.mxu0 0
    %72 = vmatpush1.bf16.msra.mxu0 0
    %73 = vmatprep.subr.bf16.mxu0 0
    %74 = vmatpush1.bf16.msra.mxu0 0
    %75 = vmatprep.subr.bf16.mxu0 0
    %76 = vmatpush1.bf16.msra.mxu0 0
    %77 = vmatprep.subr.bf16.mxu0 0
    %78 = vmatpush1.bf16.msra.mxu0 0
    %79 = vmatprep.subr.bf16.mxu0 0
    %80 = vmatpush1.bf16.msra.mxu0 0
    %81 = vmatprep.subr.bf16.mxu0 0
    %82 = vmatpush1.bf16.msra.mxu0 0
    %83 = vmatprep.subr.bf16.mxu0 0
    %84 = vmatpush1.bf16.msra.mxu0 %v64
    %85 = vmatprep.subr.bf16.mxu0 0
    %86 = vmatpush1.bf16.msra.mxu0 %v63
    %87 = vmatprep.subr.bf16.mxu0 0
    %88 = vmatpush2.bf16.msra.mxu0 0
    %89 = vmatprep.subr.bf16.mxu0 0
    %90 = vmatpush2.bf16.msra.mxu0 0
    %91 = vmatprep.subr.bf16.mxu0 0
    %92 = vmatpush2.bf16.msra.mxu0 0
    %93 = vmatprep.subr.bf16.mxu0 0
    %94 = vmatpush2.bf16.msra.mxu0 0
    %95 = vmatprep.subr.bf16.mxu0 0
    %96 = vmatpush2.bf16.msra.mxu0 0
    %97 = vmatprep.subr.bf16.mxu0 0
    %98 = vmatpush2.bf16.msra.mxu0 0
    %99 = vmatprep.subr.bf16.mxu0 0
    %100 = vmatpush2.bf16.msra.mxu0 0
    %101 = vmatprep.subr.bf16.mxu0 0
    %102 = vmatpush2.bf16.msra.mxu0 0
    %103 = vmatprep.mubr.bf16.mxu0 0
    %104 = vmatmul.mubr.bf16.gmra.mxu0 %v69
    %v105 = vpop.f32.mrf.mxu0
    %v106 = vadd.f32 0.0, %v105
    %v107 = vpop.f32.mrf.mxu0
    %v108 = vpop.f32.mrf.mxu0
    %v109 = vpop.f32.mrf.mxu0
    %110 = vdwg.mxu0
    %v111 = vpack.c.bf16 %v106, %v106
    %v112 = vld [vmem:[%s2] sm:$0x1]
    %v114 = vpack.i.b16 %v112, %v112
    %v116 = vlaneseq
    %v117 = vshrl.u32 %v116, 7
    %v118 = vsub.s32 0, %v117
    %v119 = vrot.slane %v114, %v118
    %v120 = vadd.bf16 %v111, %v119
    %v121 = vmax.bf16 %v120, 0
    %v122 = vld [vmem:[%s3] sm:$0xf]
    %123 = vmatprep.subr.bf16.mxu0 0
    %124 = vmatpush1.bf16.xpose.msra.mxu0 0
    %125 = vmatprep.subr.bf16.mxu0 0
    %126 = vmatpush1.bf16.xpose.msra.mxu0 0
    %127 = vmatprep.subr.bf16.mxu0 0
    %128 = vmatpush1.bf16.xpose.msra.mxu0 0
    %129 = vmatprep.subr.bf16.mxu0 0
    %130 = vmatpush1.bf16.xpose.msra.mxu0 0
    %131 = vmatprep.subr.bf16.mxu0 0
    %132 = vmatpush1.bf16.xpose.msra.mxu0 0
    %133 = vmatprep.subr.bf16.mxu0 0
    %134 = vmatpush1.bf16.xpose.msra.mxu0 0
    %135 = vmatprep.subr.bf16.mxu0 0
    %136 = vmatpush1.bf16.xpose.msra.mxu0 0
    %137 = vmatprep.subr.bf16.mxu0 0
    %138 = vmatpush1.bf16.xpose.msra.mxu0 %v121
    %139 = vmatprep.subr.bf16.mxu0 0
    %140 = vmatpush2.bf16.xpose.msra.mxu0 0
    %141 = vmatprep.subr.bf16.mxu0 0
    %142 = vmatpush2.bf16.xpose.msra.mxu0 0
    %143 = vmatprep.subr.bf16.mxu0 0
    %144 = vmatpush2.bf16.xpose.msra.mxu0 0
    %145 = vmatprep.subr.bf16.mxu0 0
    %146 = vmatpush2.bf16.xpose.msra.mxu0 0
    %147 = vmatprep.subr.bf16.mxu0 0
    %148 = vmatpush2.bf16.xpose.msra.mxu0 0
    %149 = vmatprep.subr.bf16.mxu0 0
    %150 = vmatpush2.bf16.xpose.msra.mxu0 0
    %151 = vmatprep.subr.bf16.mxu0 0
    %152 = vmatpush2.bf16.xpose.msra.mxu0 0
    %153 = vmatprep.subr.bf16.mxu0 0
    %154 = vmatpush2.bf16.xpose.msra.mxu0 0
    %155 = vmatprep.mubr.bf16.mxu0 0
    %156 = vmatmul.mubr.bf16.gmra.mxu0 %v122
    %v157 = vpop.f32.mrf.mxu0
    %v158 = vadd.f32 0.0, %v157
    %v159 = vpop.f32.mrf.mxu0
    %v160 = vpop.f32.mrf.mxu0
    %v161 = vpop.f32.mrf.mxu0
    %162 = vdwg.mxu0
    %s163 = sld [smem:[#allocation2]]
    %v164 = vstv %s163
    %v165 = vadd.f32 %v158, %v164
    %vm166 = vcmask 57344
    %167 = vst.msk [vmem:[#allocation8] sm:$0x1] %vm166, %v165
    // Predicated region
    $region30: #{tpu_custom_call.1} parent=1 // pred_check
      _
    $region31: #{tpu_custom_call.1} parent=1 // pred_check_branch
      %169 = sbr.rel (0) target = $region33
    $region32: #{tpu_custom_call.1} parent=1 // pred_region
      %s171 = ssub.s32 16, 16
      %172 = vsyncadd [#allocation5], %s171
      %s174 = sshll.u32 [#allocation8], 4
      %s175 = int_to_ptr.vmem [resolvable:$true] %s174
      %177 = dma.vmem_to_hbm [thread:$0]  %s175, 16, %s5, [#allocation5]
    $region33: #{tpu_custom_call.1} parent=1 // pred_fallthru
      _
    // Predicated region
    $region34: #{tpu_custom_call.1} parent=1 // pred_check
      _
    $region35: #{tpu_custom_call.1} parent=1 // pred_check_branch
      %179 = sbr.rel (0) target = $region37
    $region36: #{tpu_custom_call.1} parent=1 // pred_region
      %180 = dma.done [#allocation5], 16
    $region37: #{tpu_custom_call.1} parent=1 // pred_fallthru
      _
    %181 = vsyncpa [#allocation4], 1
    %182 = vsyncpa [#allocation7], 1
    %183 = vsyncpa [#allocation5], 1

</llo_original>
